<compile_context>
chip_gen: v7x
topology: tpu7x:2x2x1
jax: 0.10.0
libtpu: 0.0.40
codegen_flags: <defaults>
</compile_context>

<pallas_src>
import jax
import jax.numpy as jnp
from jax.experimental import pallas as pl
from jax.experimental.pallas import tpu as pltpu


def _h_sigmoid_kernel(x_ref, o_ref):
    x = x_ref[...]
    # relu6(x + 3) / 6
    y = jnp.minimum(jnp.maximum(x + 3.0, 0.0), 6.0) * (1.0 / 6.0)
    o_ref[...] = y.astype(o_ref.dtype)


_TARGET_BLOCK_BYTES = 2 * 1024 * 1024  # ~2 MiB/block: HBM-roofline sweet spot
_SUB_ALIGN = 32                        # sublane alignment good for f32/bf16/int8


def _round_up(x: int, m: int) -> int:
    return -(-x // m) * m


def h_sigmoid(x: jax.Array) -> jax.Array:
    """Hard sigmoid: relu6(x + 3) / 6, elementwise. Any input shape/layout."""
    orig_shape = x.shape
    orig_dtype = x.dtype
    n = x.size
    if n == 0:
        return x

    itemsize = jnp.dtype(orig_dtype).itemsize

    # Widest lane-dense last dim that divides the element count exactly:
    # keeps the common case a zero-copy reshape (no jnp.pad, no slice).
    lanes = None
    for cand in (1024, 512, 256, 128):
        if n % cand == 0:
            lanes = cand
            break

    flat = x.reshape(-1)
    if lanes is None:
        # Rare fallback: pad only up to the next multiple of 128 lanes.
        lanes = 128
        padded = _round_up(n, lanes)
        flat = jnp.pad(flat, (0, padded - n))
        rows = padded // lanes
        needs_unpad = True
    else:
        rows = n // lanes
        needs_unpad = False

    x2d = flat.reshape(rows, lanes)

    # Row tile sized for ~2 MiB blocks, aligned to 32 sublanes. Pallas masks
    # the ragged last block, so rows need not be a multiple of the tile.
    target_rows = max(
        _SUB_ALIGN,
        (_TARGET_BLOCK_BYTES // (lanes * itemsize)) // _SUB_ALIGN * _SUB_ALIGN,
    )
    if rows > 2 * _SUB_ALIGN:
        # Keep at least 2 grid steps so v7x's two TensorCores both get work.
        half = _round_up(-(-rows // 2), _SUB_ALIGN)
        target_rows = min(target_rows, half)
    row_tile = min(target_rows, rows)  # small inputs: block covers full axis
    grid = (pl.cdiv(rows, row_tile),)

    out2d = pl.pallas_call(
        _h_sigmoid_kernel,
        out_shape=jax.ShapeDtypeStruct((rows, lanes), orig_dtype),
        grid_spec=pltpu.PrefetchScalarGridSpec(
            num_scalar_prefetch=0,
            grid=grid,
            in_specs=[pl.BlockSpec((row_tile, lanes), lambda i: (i, 0))],
            out_specs=pl.BlockSpec((row_tile, lanes), lambda i: (i, 0)),
        ),
        compiler_params=pltpu.CompilerParams(
            dimension_semantics=("parallel",),
        ),
    )(x2d)

    out_flat = out2d.reshape(-1)
    if needs_unpad:
        out_flat = out_flat[:n]
    return out_flat.reshape(orig_shape)


def _ref(x):
    return jnp.clip(x + 3.0, 0.0, 6.0) / 6.0


if __name__ == "__main__":
    key = jax.random.PRNGKey(0)

    # Primary test: NCHW input, batch=2, channels=4, spatial=16x16.
    x = jax.random.normal(key, (2, 4, 16, 16), dtype=jnp.float32) * 4.0
    y = jax.block_until_ready(h_sigmoid(x))
    assert y.shape == x.shape and y.dtype == x.dtype
    assert jnp.allclose(y, _ref(x), atol=1e-6), "mismatch vs reference (main)"

    # Multi-block path (grid > 1).
    k1, k2 = jax.random.split(key)
    x_big = jax.random.normal(k1, (4, 32, 64, 64), dtype=jnp.float32) * 4.0
    y_big = jax.block_until_ready(h_sigmoid(x_big))
    assert jnp.allclose(y_big, _ref(x_big), atol=1e-6), "mismatch vs reference (big)"

    # Ragged / pad fallback path (element count not a multiple of 128).
    x_odd = jax.random.normal(k2, (2, 3, 7, 5), dtype=jnp.float32) * 4.0
    y_odd = jax.block_until_ready(h_sigmoid(x_odd))
    assert y_odd.shape == x_odd.shape
    assert jnp.allclose(y_odd, _ref(x_odd), atol=1e-6), "mismatch vs reference (odd)"

    print("KERNEL_OK")
</pallas_src>

<mosaic_0001>
module attributes {stable_mosaic.version = 11 : i64} {
  func.func @_h_sigmoid_kernel(%arg0: i32, %arg1: memref<2x1024xf32, #tpu.memory_space<vmem>>, %arg2: memref<2x1024xf32, #tpu.memory_space<vmem>>) attributes {dimension_semantics = [#tpu.dimension_semantics<parallel>], iteration_bounds = array<i64: 1>, scalar_prefetch = 0 : i64, scratch_operands = 0 : i64, tpu.core_type = #tpu.core_type<tc>, window_params = [{transform_indices = @transform_0, window_bounds = array<i64: 2, 1024>}, {transform_indices = @transform_1, window_bounds = array<i64: 2, 1024>}]} {
    %c0 = arith.constant 0 : index
    %c0_0 = arith.constant 0 : index
    %0 = vector.load %arg1[%c0, %c0_0] : memref<2x1024xf32, #tpu.memory_space<vmem>>, vector<2x1024xf32>
    %cst = arith.constant 3.000000e+00 : f32
    %1 = vector.broadcast %cst : f32 to vector<2x1024xf32>
    %2 = arith.addf %0, %1 : vector<2x1024xf32>
    %cst_1 = arith.constant 0.000000e+00 : f32
    %3 = vector.broadcast %cst_1 : f32 to vector<2x1024xf32>
    %4 = arith.maximumf %2, %3 : vector<2x1024xf32>
    %cst_2 = arith.constant 6.000000e+00 : f32
    %5 = vector.broadcast %cst_2 : f32 to vector<2x1024xf32>
    %6 = arith.minimumf %4, %5 : vector<2x1024xf32>
    %cst_3 = arith.constant 0.166666672 : f32
    %7 = vector.broadcast %cst_3 : f32 to vector<2x1024xf32>
    %8 = arith.mulf %6, %7 : vector<2x1024xf32>
    %c0_4 = arith.constant 0 : index
    %c0_5 = arith.constant 0 : index
    %9 = vector.load %arg2[%c0_4, %c0_5] : memref<2x1024xf32, #tpu.memory_space<vmem>>, vector<2x1024xf32>
    tpu.vector_store %arg2[%c0_4, %c0_5], %8 {strides = array<i32>} : memref<2x1024xf32, #tpu.memory_space<vmem>>, vector<2x1024xf32>,
    return
  }
  func.func @transform_0(%arg0: i32) -> (i32, i32) {
    %c0_i32 = arith.constant 0 : i32
    %c0_i32_0 = arith.constant 0 : i32
    return %arg0, %c0_i32 : i32, i32
  }
  func.func @transform_1(%arg0: i32) -> (i32, i32) {
    %c0_i32 = arith.constant 0 : i32
    %c0_i32_0 = arith.constant 0 : i32
    return %arg0, %c0_i32 : i32, i32
  }
}

</mosaic_0001>

<llo_original>
// kernel: tpu_custom_call.1
$region0: #{tpu_custom_call.1}
  #allocation0 [shape = 'u32[]', space=smem, size = 0x4, offset = 0x4, fixed_abs, tag = 'smem constant byte address 0x4 - core index']
  #allocation1 [shape = 'u32[144,128]{1,0:T(1,128)}', space=vmem, size = 0x12000, scoped, tag = 'internal scratch']
  %s0 = inlined_call_operand.hbm [shape: f32[2,1024], index: 0, kind: input, shape index: {}]
  %s1 = inlined_call_operand.hbm [shape: f32[2,1024], index: 1, kind: output, shape index: {}]
  %s2 = sld [smem:[#allocation0]]
  $region18: #{tpu_custom_call.1} parent=0
    _
  %s4 = ssub.s32 1, %s2
  %s5 = scalar_select 0, %s4, %s2
  $region1: #{tpu_custom_call.1} parent=0
    #allocation2 [shape = 'u8[8192]{0}', space=vmem, size = 0x2000, scoped, tag = 'input window, operand 0, single buffered']
    #allocation3 [shape = 's32[1]{0}', space=sflag, size = 0x4, scoped, tag = 'scoped memory for tpu_custom_call.1']
    #allocation4 [shape = 's32[1]{0}', space=sflag, size = 0x4, scoped, tag = 'scoped memory for tpu_custom_call.1']
    #allocation5 [shape = 'u8[8192]{0}', space=vmem, size = 0x2000, scoped, tag = 'output window, operand 0, single buffered']
    %6 = vsyncpa [#allocation3], 0
    %7 = vsyncpa [#allocation4], 0
    // Predicated region
    $region2: #{tpu_custom_call.1} parent=1 // pred_check
      _
    $region3: #{tpu_custom_call.1} parent=1 // pred_check_branch
      %9 = sbr.rel (0) target = $region5
    $region4: #{tpu_custom_call.1} parent=1 // pred_region
      %s11 = ssub.s32 256, 256
      %12 = vsyncadd [#allocation3], %s11
      %s14 = sshll.u32 [#allocation2], 4
      %s15 = int_to_ptr.vmem [resolvable:$true] %s14
      %17 = dma.hbm_to_vmem [thread:$0]  %s0, 256, %s15, [#allocation3]
    $region5: #{tpu_custom_call.1} parent=1 // pred_fallthru
      _
    // Predicated region
    $region6: #{tpu_custom_call.1} parent=1 // pred_check
      _
    $region7: #{tpu_custom_call.1} parent=1 // pred_check_branch
      %19 = sbr.rel (0) target = $region9
    $region8: #{tpu_custom_call.1} parent=1 // pred_region
      %20 = dma.done [#allocation3], 256
    $region9: #{tpu_custom_call.1} parent=1 // pred_fallthru
      _
    %v21 = vld [vmem:[#allocation2] sm:$0xff]
    %v22 = vld [vmem:[#allocation2 + $0x8] sm:$0xff]
    %v23 = vadd.f32 %v21, 3.0
    %v24 = vadd.f32 %v22, 3.0
    %v25 = vmax.f32 %v23, 0.0
    %v26 = vmax.f32 %v24, 0.0
    %v27 = vmin.f32 %v25, 6.0
    %v28 = vmin.f32 %v26, 6.0
    %v29 = vmul.f32 %v27, 0.16666667
    %v30 = vmul.f32 %v28, 0.16666667
    %31 = vst [vmem:[#allocation5] sm:$0xff] %v29
    %32 = vst [vmem:[#allocation5 + $0x8] sm:$0xff] %v30
    // Predicated region
    $region10: #{tpu_custom_call.1} parent=1 // pred_check
      _
    $region11: #{tpu_custom_call.1} parent=1 // pred_check_branch
      %34 = sbr.rel (0) target = $region13
    $region12: #{tpu_custom_call.1} parent=1 // pred_region
      %s36 = ssub.s32 256, 256
      %37 = vsyncadd [#allocation4], %s36
      %s39 = sshll.u32 [#allocation5], 4
      %s40 = int_to_ptr.vmem [resolvable:$true] %s39
      %42 = dma.vmem_to_hbm [thread:$0]  %s40, 256, %s1, [#allocation4]
    $region13: #{tpu_custom_call.1} parent=1 // pred_fallthru
      _
    // Predicated region
    $region14: #{tpu_custom_call.1} parent=1 // pred_check
      _
    $region15: #{tpu_custom_call.1} parent=1 // pred_check_branch
      %44 = sbr.rel (0) target = $region17
    $region16: #{tpu_custom_call.1} parent=1 // pred_region
      %45 = dma.done [#allocation4], 256
    $region17: #{tpu_custom_call.1} parent=1 // pred_fallthru
      _
    %46 = vsyncpa [#allocation3], 1
    %47 = vsyncpa [#allocation4], 1

</llo_original>
